<compile_context>
chip_gen: v7x
topology: tpu7x:2x2x1
jax: 0.10.0
libtpu: 0.0.40
codegen_flags: <defaults>
</compile_context>

<pallas_src>
import functools

import jax
import jax.numpy as jnp
from jax import lax
from jax.experimental import pallas as pl
from jax.experimental.pallas import tpu as pltpu


def _cdiv(a, b):
    return -(-a // b)


def _vmem_capacity_bytes():
    """Per-core VMEM capacity for this generation (128 MiB v5e/v6e, 64 MiB/TC on
    v7x); conservative fallback if the query is unavailable."""
    try:
        cap = getattr(pltpu.get_tpu_info(), "vmem_capacity_bytes", None)
        if cap:
            return int(cap)
    except Exception:
        pass
    return 64 * 1024 * 1024


def _pick_compute_dtype(io_dtype):
    """bf16 I/O -> bf16 elementwise math on chips with a bf16 VPU (v6e/v7x):
    halves VALU op count and drops the up/down casts.  v5e and older have no
    bf16 VPU/EUP, so keep f32 math there.  Everything else -> f32."""
    if io_dtype != jnp.dtype(jnp.bfloat16):
        return jnp.dtype(jnp.float32)
    kind = ""
    try:
        kind = jax.devices()[0].device_kind.lower()
    except Exception:
        pass
    if any(v in kind for v in ("v2", "v3", "v4", "v5")):
        return jnp.dtype(jnp.float32)
    return jnp.dtype(jnp.bfloat16)


def _choose_tiling(B, H, S, D, io_item, comp_item, same_dtype, vmem_cap,
                   max_block_bytes=None):
    """Pick (heads-per-block, seq-tile) such that
       * one I/O block targets ~4-8 MiB (HBM-roofline sweet spot) but never
         more than vmem_cap/16 (fits v7x's 64 MiB VMEM),
       * double-buffered in+out blocks plus in-kernel temporaries stay under
         ~half the generation's VMEM capacity, and
       * the grid has >= 4 steps so both v7x TensorCores get work."""
    sub = 8 * max(1, 4 // io_item)                 # 8 rows for f32, 16 for bf16
    s_ceil = _cdiv(S, sub) * sub
    blk_cap = max_block_bytes or min(8 << 20, vmem_cap // 16)
    budget = vmem_cap // 2
    tmp_factor = 2 if same_dtype else 3            # rotated/out (+ f32 upcast of x)

    def per_row(hg):
        io = hg * D * io_item
        tmp = hg * D * comp_item * tmp_factor + 4 * D * 4  # + cos/sin/mask rows
        return io, tmp

    def max_ts(hg):
        io, tmp = per_row(hg)
        t = min(s_ceil, blk_cap // max(io, 1), budget // (4 * io + tmp))
        return max(sub, (t // sub) * sub)

    def fits(hg, ts):
        io, tmp = per_row(hg)
        return io * ts <= blk_cap and (4 * io + tmp) * ts <= budget

    def n_steps(hg, ts):
        return B * (H // hg) * _cdiv(S, ts)

    # Largest head group (best cos/sin amortisation, biggest blocks) that still
    # fits VMEM and leaves >= 4 grid steps.
    for cand in sorted((g for g in range(1, H + 1) if H % g == 0), reverse=True):
        t = max_ts(cand)
        if fits(cand, t) and n_steps(cand, t) >= 4:
            hg, ts = cand, t
            break
    else:
        hg = 1
        ts = max_ts(1)
    # Still too few steps (tiny B*H): shrink the seq tile down to the sublane
    # granularity instead of leaving one TensorCore idle.
    while n_steps(hg, ts) < 4 and ts > sub:
        ts = max(sub, ((ts // 2 + sub - 1) // sub) * sub)
    return hg, ts


def _rope_kernel(theta_ref, x_ref, o_ref, *, d, seq_tile, compute_dtype,
                 use_roll):
    """One (batch, head-group, seq-tile) step: rotate a (hg, tS, D) slab.

    theta_ref: (1, D)       signed per-lane angular frequencies (f32); 0 in
                            pass-through lanes (=> cos 1, sin 0 there).
    x_ref:     (hg, tS, D)  input tile  (batch dim squeezed away).
    o_ref:     (hg, tS, D)  output tile.
    """
    D = x_ref.shape[-1]
    d2 = d // 2

    # Absolute positions of the rows in this sequence tile (shared by all heads
    # in the block).  Rows past the true sequence length (ragged tail) produce
    # finite cos/sin; their output rows are clipped by the pipeline.
    row = lax.broadcasted_iota(jnp.int32, (seq_tile, 1), 0)
    pos = (pl.program_id(2) * seq_tile + row).astype(jnp.float32)       # (tS, 1)

    # Angle / cos / sin in f32 (matches the torch f32 cache), computed once per
    # grid step, cast ONCE to the compute dtype (bf16 on v6e+/v7x).
    angle = pos * theta_ref[...]                                        # (tS, D)
    cos = jnp.cos(angle).astype(compute_dtype)[None]                    # (1,tS,D)
    sin = jnp.sin(angle).astype(compute_dtype)[None]

    x = x_ref[...]                                                      # (hg,tS,D)
    if x.dtype != compute_dtype:
        x = x.astype(compute_dtype)

    lane = None
    if d < D:
        lane = lax.broadcasted_iota(jnp.int32, (seq_tile, D), 1)[None]  # (1,tS,D)

    if use_roll and d == D:
        # Swap the two feature halves with a single lane rotation (XLU slot).
        rotated = pltpu.roll(x, shift=d2, axis=x.ndim - 1)
    elif use_roll:
        # Partial rotary on a lane-aligned head_dim: two XLU rolls + one VPU
        # select replace the old non-aligned lane concatenate (no VMEM copy).
        fwd = pltpu.roll(x, shift=d2, axis=x.ndim - 1)      # lane i <- x[i - d2]
        bwd = pltpu.roll(x, shift=D - d2, axis=x.ndim - 1)  # lane i <- x[i + d2]
        rotated = jnp.where(lane < d2, bwd, fwd)            # lanes >= d: don't care
    else:
        # head_dim not a multiple of 128: static lane shuffle fallback.
        parts = [x[..., d2:d], x[..., :d2]]
        if d < D:
            parts.append(x[..., d:])
        rotated = jnp.concatenate(parts, axis=-1)

    # sin carries the half-rotation sign (theta table is signed).
    out = x * cos + rotated * sin
    if d < D:
        out = jnp.where(lane < d, out, x)    # exact pass-through of lanes [d, D)
    o_ref[...] = out.astype(o_ref.dtype)


def rotary_positional_embeddings(x, *, d, base=10000, inplace=False,
                                 max_block_bytes=None):
    """Pallas equivalent of RotaryPositionalEmbeddings.forward.

    x: [B, H, S, D] (the layout the PyTorch forward receives / returns)
    d: number of rotary features (even, <= D); features [d, D) pass through.
    """
    B, H, S, D = x.shape
    d = int(d)
    if d % 2 != 0 or not (0 < d <= D):
        raise ValueError(f"d must be even and in (0, {D}], got {d}")
    d2 = d // 2

    io_dtype = jnp.dtype(x.dtype)
    compute_dtype = _pick_compute_dtype(io_dtype)
    io_item = io_dtype.itemsize
    comp_item = compute_dtype.itemsize
    same = compute_dtype == io_dtype

    vmem_cap = _vmem_capacity_bytes()
    hg, tS = _choose_tiling(B, H, S, D, io_item, comp_item, same, vmem_cap,
                            max_block_bytes)
    grid = (B, H // hg, _cdiv(S, tS))

    # Signed per-lane angular frequencies, built host-side in f32 (matches the
    # torch f32 cache).  Lanes [0,d/2): -theta_k, [d/2,d): +theta_k (sin sign
    # folded in), pass-through lanes [d,D): 0.
    theta = 1.0 / (float(base)
                   ** (jnp.arange(0, d, 2, dtype=jnp.float32) / float(d)))
    table = (jnp.zeros((1, D), jnp.float32)
             .at[0, :d2].set(-theta).at[0, d2:d].set(theta))

    # Explicit scoped-VMEM limit: double-buffered in+out blocks + in-kernel
    # temporaries + margin, clipped to ~3/4 of this generation's capacity.
    io_blk = hg * tS * D * io_item
    tmp_bytes = hg * tS * D * comp_item * (2 if same else 3) + 4 * tS * D * 4
    vmem_limit = int(max(32 << 20,
                         min(4 * io_blk + tmp_bytes + (4 << 20),
                             vmem_cap * 3 // 4)))

    kernel = functools.partial(_rope_kernel, d=d, seq_tile=tS,
                               compute_dtype=compute_dtype,
                               use_roll=(D % 128 == 0))

    blk = (pl.Squeezed(), hg, tS, D)
    idx = lambda b, h, s: (b, h, s, 0)

    return pl.pallas_call(
        kernel,
        out_shape=jax.ShapeDtypeStruct((B, H, S, D), x.dtype),
        grid_spec=pltpu.PrefetchScalarGridSpec(
            num_scalar_prefetch=0,
            grid=grid,
            in_specs=[
                # Tiny theta table; block index never changes -> fetched once.
                pl.BlockSpec((1, D), lambda b, h, s: (0, 0)),
                pl.BlockSpec(blk, idx),
            ],
            out_specs=pl.BlockSpec(blk, idx),
        ),
        compiler_params=pltpu.CompilerParams(
            dimension_semantics=("parallel", "parallel", "parallel"),
            vmem_limit_bytes=vmem_limit),
        # Optional in-place update (halves peak HBM footprint for large caches).
        input_output_aliases=({1: 0} if inplace else {}),
    )(table, x)


def rope_reference(x, d, base):
    """Pure-JAX transcription of the PyTorch forward, for verification."""
    B, H, S, D = x.shape
    d = int(d)
    d2 = d // 2
    theta = 1.0 / (float(base)
                   ** (jnp.arange(0, d, 2, dtype=jnp.float32) / float(d)))
    seq_idx = jnp.arange(S, dtype=jnp.float32)
    idx_theta = jnp.einsum('n,k->nk', seq_idx, theta)
    idx_theta2 = jnp.concatenate([idx_theta, idx_theta], axis=-1)       # (S, d)
    cos = jnp.cos(idx_theta2)[None, None, :, :]
    sin = jnp.sin(idx_theta2)[None, None, :, :]
    xf = x.astype(jnp.float32)
    x_rope, x_pass = xf[..., :d], xf[..., d:]
    neg_half = jnp.concatenate([-x_rope[..., d2:], x_rope[..., :d2]], axis=-1)
    x_rope = x_rope * cos + neg_half * sin
    return jnp.concatenate([x_rope, x_pass], axis=-1).astype(x.dtype)


if __name__ == "__main__":
    key = jax.random.PRNGKey(0)
    k1, k2, k3, k4 = jax.random.split(key, 4)

    # Loose enough to absorb EUP-vs-XLA transcendental differences; layout/sign
    # bugs would show up as O(1) errors.
    tol = dict(atol=1e-3, rtol=1e-3)

    # 1) Lane-dense head_dim, full rotary (single-roll path), f32.
    x1 = jax.random.normal(k1, (2, 4, 16, 128), dtype=jnp.float32)
    out1 = rotary_positional_embeddings(x1, d=128)
    jax.block_until_ready(out1)
    ref1 = rope_reference(x1, 128, 10000.0)
    assert out1.shape == x1.shape, out1.shape
    assert jnp.allclose(out1, ref1, **tol), float(jnp.max(jnp.abs(out1 - ref1)))

    # 2) Partial rotary on a non-128-multiple head_dim (shuffle fallback +
    #    exact pass-through of features [d, D)).
    x2 = jax.random.normal(k2, (2, 4, 8, 32), dtype=jnp.float32)
    out2 = rotary_positional_embeddings(x2, d=16)
    jax.block_until_ready(out2)
    ref2 = rope_reference(x2, 16, 10000.0)
    assert jnp.allclose(out2, ref2, **tol), float(jnp.max(jnp.abs(out2 - ref2)))

    # 3) bf16 I/O (bf16 math on v6e+/v7x, f32 math on v5e).
    x3 = jax.random.normal(k3, (2, 8, 32, 128), dtype=jnp.bfloat16)
    out3 = rotary_positional_embeddings(x3, d=128)
    jax.block_until_ready(out3)
    ref3 = rope_reference(x3, 128, 10000.0)
    assert out3.dtype == jnp.bfloat16
    err = float(jnp.max(jnp.abs(out3.astype(jnp.float32)
                                - ref3.astype(jnp.float32))))
    assert err < 0.15, err

    # 4) Ragged sequence length (partial trailing seq tile via the cdiv grid)
    #    + partial rotary on a lane-aligned head_dim (two-roll + lane mask).
    x4 = jax.random.normal(k4, (1, 2, 20, 128), dtype=jnp.float32)
    out4 = rotary_positional_embeddings(x4, d=64)
    jax.block_until_ready(out4)
    ref4 = rope_reference(x4, 64, 10000.0)
    assert jnp.allclose(out4, ref4, **tol), float(jnp.max(jnp.abs(out4 - ref4)))

    print("KERNEL_OK")
</pallas_src>

<mosaic_0001>
module attributes {stable_mosaic.version = 11 : i64} {
  func.func @_rope_kernel(%arg0: i32, %arg1: i32, %arg2: i32, %arg3: memref<1x128xf32, #tpu.memory_space<vmem>>, %arg4: memref<1x2x16x128xf32, #tpu.memory_space<vmem>>, %arg5: memref<1x2x16x128xf32, #tpu.memory_space<vmem>>) attributes {dimension_semantics = [#tpu.dimension_semantics<parallel>, #tpu.dimension_semantics<parallel>, #tpu.dimension_semantics<parallel>], iteration_bounds = array<i64: 2, 2, 1>, scalar_prefetch = 0 : i64, scratch_operands = 0 : i64, tpu.core_type = #tpu.core_type<tc>, window_params = [{pipeline_mode = #tpu.pipeline_mode<synchronous>, transform_indices = @transform_0, window_bounds = array<i64: 1, 128>}, {transform_indices = @transform_1, window_bounds = array<i64: 1, 2, 16, 128>}, {transform_indices = @transform_2, window_bounds = array<i64: 1, 2, 16, 128>}]} {
    %0 = tpu.iota {dimensions = array<i32: 0>} : vector<16x1xi32>
    %c16_i32 = arith.constant 16 : i32
    %1 = arith.muli %arg2, %c16_i32 : i32
    %2 = vector.broadcast %1 : i32 to vector<16x1xi32>
    %3 = arith.addi %2, %0 : vector<16x1xi32>
    %4 = arith.sitofp %3 : vector<16x1xi32> to vector<16x1xf32>
    %c0 = arith.constant 0 : index
    %c0_0 = arith.constant 0 : index
    %5 = vector.load %arg3[%c0, %c0_0] : memref<1x128xf32, #tpu.memory_space<vmem>>, vector<1x128xf32>
    %6 = vector.broadcast %4 : vector<16x1xf32> to vector<16x128xf32>
    %7 = vector.broadcast %5 : vector<1x128xf32> to vector<16x128xf32>
    %8 = arith.mulf %6, %7 : vector<16x128xf32>
    %9 = math.cos %8 : vector<16x128xf32>
    %10 = vector.shape_cast %9 : vector<16x128xf32> to vector<1x16x128xf32>
    %11 = math.sin %8 : vector<16x128xf32>
    %12 = vector.shape_cast %11 : vector<16x128xf32> to vector<1x16x128xf32>
    %c0_1 = arith.constant 0 : index
    %c0_2 = arith.constant 0 : index
    %c0_3 = arith.constant 0 : index
    %c0_4 = arith.constant 0 : index
    %13 = vector.load %arg4[%c0_1, %c0_2, %c0_3, %c0_4] : memref<1x2x16x128xf32, #tpu.memory_space<vmem>>, vector<1x2x16x128xf32>
    %14 = vector.shape_cast %13 : vector<1x2x16x128xf32> to vector<2x16x128xf32>
    %c64_i32 = arith.constant 64 : i32
    %15 = tpu.dynamic_rotate %14 by %c64_i32 dim 2 : vector<2x16x128xf32>, i32 -> vector<2x16x128xf32>
    %16 = vector.broadcast %10 : vector<1x16x128xf32> to vector<2x16x128xf32>
    %17 = arith.mulf %14, %16 : vector<2x16x128xf32>
    %18 = vector.broadcast %12 : vector<1x16x128xf32> to vector<2x16x128xf32>
    %19 = arith.mulf %15, %18 : vector<2x16x128xf32>
    %20 = arith.addf %17, %19 : vector<2x16x128xf32>
    %c0_5 = arith.constant 0 : index
    %c0_6 = arith.constant 0 : index
    %c0_7 = arith.constant 0 : index
    %c0_8 = arith.constant 0 : index
    %21 = vector.load %arg5[%c0_5, %c0_6, %c0_7, %c0_8] : memref<1x2x16x128xf32, #tpu.memory_space<vmem>>, vector<1x2x16x128xf32>
    %22 = vector.shape_cast %21 : vector<1x2x16x128xf32> to vector<2x16x128xf32>
    %23 = vector.shape_cast %20 : vector<2x16x128xf32> to vector<1x2x16x128xf32>
    tpu.vector_store %arg5[%c0_5, %c0_6, %c0_7, %c0_8], %23 {strides = array<i32>} : memref<1x2x16x128xf32, #tpu.memory_space<vmem>>, vector<1x2x16x128xf32>,
    return
  }
  func.func @transform_0(%arg0: i32, %arg1: i32, %arg2: i32) -> (i32, i32) {
    %c0_i32 = arith.constant 0 : i32
    %c0_i32_0 = arith.constant 0 : i32
    %c0_i32_1 = arith.constant 0 : i32
    return %c0_i32, %c0_i32_0 : i32, i32
  }
  func.func @transform_1(%arg0: i32, %arg1: i32, %arg2: i32) -> (i32, i32, i32, i32) {
    %c0_i32 = arith.constant 0 : i32
    %c0_i32_0 = arith.constant 0 : i32
    return %arg0, %arg1, %arg2, %c0_i32 : i32, i32, i32, i32
  }
  func.func @transform_2(%arg0: i32, %arg1: i32, %arg2: i32) -> (i32, i32, i32, i32) {
    %c0_i32 = arith.constant 0 : i32
    %c0_i32_0 = arith.constant 0 : i32
    return %arg0, %arg1, %arg2, %c0_i32 : i32, i32, i32, i32
  }
}

</mosaic_0001>

<llo_original>
// kernel: tpu_custom_call.1
$region0: #{tpu_custom_call.1}
  #allocation0 [shape = 'u32[]', space=smem, size = 0x4, offset = 0x4, fixed_abs, tag = 'smem constant byte address 0x4 - core index']
  #allocation1 [shape = 'u32[144,128]{1,0:T(1,128)}', space=vmem, size = 0x12000, scoped, tag = 'internal scratch']
  %s0 = inlined_call_operand.hbm [shape: f32[1,128], index: 0, kind: input, shape index: {}]
  %s1 = inlined_call_operand.hbm [shape: f32[2,4,16,128], index: 1, kind: input, shape index: {}]
  %s2 = inlined_call_operand.hbm [shape: f32[2,4,16,128], index: 2, kind: output, shape index: {}]
  %s3 = sld [smem:[#allocation0]]
  $region49: #{tpu_custom_call.1} parent=0
    _
  %s5 = ssub.s32 1, %s3
  %s6 = scalar_select 0, %s5, %s3
  $region1: #{tpu_custom_call.1} parent=0
    #allocation2 [shape = 'u8[512]{0}', space=vmem, size = 0x400, scoped, tag = 'input window, operand 0, single buffered']
    #allocation3 [shape = 's32[2]{0}', space=sflag, size = 0x8, scoped, tag = 'scoped memory for tpu_custom_call.1']
    #allocation4 [shape = 's32[2]{0}', space=sflag, size = 0x8, scoped, tag = 'scoped memory for tpu_custom_call.1']
    #allocation5 [shape = 'u8[32768]{0}', space=vmem, size = 0x8000, scoped, tag = 'input window, operand 1']
    #allocation6 [shape = 's32[2]{0}', space=sflag, size = 0x8, scoped, tag = 'scoped memory for tpu_custom_call.1']
    #allocation7 [shape = 'u8[32768]{0}', space=vmem, size = 0x8000, scoped, tag = 'output window, operand 0']
    %7 = vsyncpa [#allocation3], 0
    %8 = vsyncpa [#allocation6], 0
    %s9 = scalar_lea.sflag [#allocation6], 1
    %10 = vsyncpa %s9, 0
    %11 = vsyncpa [#allocation4], 0
    %s12 = scalar_lea.sflag [#allocation4], 1
    %13 = vsyncpa %s12, 0
    loop: start=0, step=1, limit=6
    $region2: #{tpu_custom_call.1} parent=1 // loop_pre_header
      _
    $region3: #{tpu_custom_call.1} parent=1 // loop_header
      %s15 = sphi 0, %s19
      %p16 = scmp.ge.s32.totalorder %s15, 6
      %s22 = sphi 0, %s41
      %s23 = sphi 0, %s37
      %s24 = sphi 0, %s33
      %s25 = sphi 0, %s22
      %s26 = sphi 0, %s23
      %s27 = sphi 0, %s24
      %s28 = sphi 0, %s25
      %s29 = sphi 0, %s26
      %s30 = sphi 0, %s27
      %s42 = sphi 0, %s42
      %s44 = sphi 0, %s42
      %s45 = sphi 0, %s44
      %s59 = sphi 0, %s45
      %s69 = sphi 0, %s71
      %s72 = sphi 0, %s69
      %s73 = sphi 0, %s72
      %s89 = sphi 0, %s73
      %s99 = sphi 0, %s101
      %s102 = sphi 0, %s99
      %s103 = sphi 0, %s102
      %s119 = sphi 0, %s103
    $region4: #{tpu_custom_call.1} parent=1 // loop_header_branch
      %18 = sbr.rel (%p16) target = $region8
    $region5: #{tpu_custom_call.1} parent=1 // loop_body
      %s20 = ssub.s32 %s15, 1
      %s21 = ssub.s32 %s15, 2
      %s31 = sadd.s32 1, %s24
      %p32 = scmp.ge.s32.totalorder %s31, 1
      %s33 = scalar_select %p32, 0, %s31
      %s34 = sadd.s32 1, %s23
      %s35 = scalar_select %p32, %s34, %s23
      %p36 = scmp.ge.s32.totalorder %s35, 2
      %s37 = scalar_select %p36, 0, %s35
      %s38 = sadd.s32 1, %s22
      %s39 = scalar_select %p36, %s38, %s22
      %p40 = scmp.ge.s32.totalorder %s39, 2
      %s41 = scalar_select %p40, 0, %s39
      %s43 = sadd.s32 %s42, 1
      %p46 = scmp.eq.s32.totalorder %s15, 3
      %p47 = scmp.ne.s32.totalorder %s42, %s44
      %p48 = scmp.eq.s32.totalorder %s15, 0
      %p49 = por %p47, %p48
      %p50 = scmp.ne.s32.totalorder %s42, %s44
      %p51 = scmp.eq.s32.totalorder %s20, 3
      %p52 = por %p50, %p51
      %p53 = scmp.ne.s32.totalorder %s44, %s45
      %p54 = scmp.eq.s32.totalorder %s20, 0
      %p55 = por %p53, %p54
      %p56 = scmp.ne.s32.totalorder %s44, %s45
      %p57 = scmp.eq.s32.totalorder %s21, 3
      %p58 = por %p56, %p57
      %p60 = scmp.ne.s32.totalorder %s45, %s59
      %p61 = scmp.eq.s32.totalorder %s21, 0
      %p62 = por %p60, %p61
      %s63 = ssub.s32 %s22, %s41
      %s64 = ssub.s32 %s23, %s37
      %s65 = sor.u32 %s63, %s64
      %s66 = ssub.s32 %s24, %s33
      %s67 = sor.u32 %s65, %s66
      %p68 = scmp.eq.s32.totalorder %s67, 0
      %s70 = sadd.s32 %s69, 1
      %s71 = scalar_select %p68, %s69, %s70
      %p74 = pneg %p68
      %p75 = scmp.eq.s32.totalorder %s15, 3
      %p76 = por %p74, %p75
      %p77 = scmp.ne.s32.totalorder %s69, %s72
      %p78 = scmp.eq.s32.totalorder %s15, 0
      %p79 = por %p77, %p78
      %p80 = scmp.ne.s32.totalorder %s69, %s72
      %p81 = scmp.eq.s32.totalorder %s20, 3
      %p82 = por %p80, %p81
      %p83 = scmp.ne.s32.totalorder %s72, %s73
      %p84 = scmp.eq.s32.totalorder %s20, 0
      %p85 = por %p83, %p84
      %p86 = scmp.ne.s32.totalorder %s72, %s73
      %p87 = scmp.eq.s32.totalorder %s21, 3
      %p88 = por %p86, %p87
      %p90 = scmp.ne.s32.totalorder %s73, %s89
      %p91 = scmp.eq.s32.totalorder %s21, 0
      %p92 = por %p90, %p91
      %s93 = ssub.s32 %s22, %s41
      %s94 = ssub.s32 %s23, %s37
      %s95 = sor.u32 %s93, %s94
      %s96 = ssub.s32 %s24, %s33
      %s97 = sor.u32 %s95, %s96
      %p98 = scmp.eq.s32.totalorder %s97, 0
      %s100 = sadd.s32 %s99, 1
      %s101 = scalar_select %p98, %s99, %s100
      %p104 = pneg %p98
      %p105 = scmp.eq.s32.totalorder %s15, 3
      %p106 = por %p104, %p105
      %p107 = scmp.ne.s32.totalorder %s99, %s102
      %p108 = scmp.eq.s32.totalorder %s15, 0
      %p109 = por %p107, %p108
      %p110 = scmp.ne.s32.totalorder %s99, %s102
      %p111 = scmp.eq.s32.totalorder %s20, 3
      %p112 = por %p110, %p111
      %p113 = scmp.ne.s32.totalorder %s102, %s103
      %p114 = scmp.eq.s32.totalorder %s20, 0
      %p115 = por %p113, %p114
      %p116 = scmp.ne.s32.totalorder %s102, %s103
      %p117 = scmp.eq.s32.totalorder %s21, 3
      %p118 = por %p116, %p117
      %p120 = scmp.ne.s32.totalorder %s103, %s119
      %p121 = scmp.eq.s32.totalorder %s21, 0
      %p122 = por %p120, %p121
      %p123 = scmp.le.s32.totalorder 1, %s15
      %p124 = scmp.lt.s32.totalorder %s15, 5
      %p125 = pnand %p123, %p124
      %p126 = pneg %p125
      // Predicated region
      $region9: #{tpu_custom_call.1} parent=5 // pred_check
        _
      $region10: #{tpu_custom_call.1} parent=5 // pred_check_branch
        %128 = sbr.rel (%p125) target = $region12
      $region11: #{tpu_custom_call.1} parent=5 // pred_region
        %s129 = ssub.s32 %s15, 1
        // Predicated region
        $region13: #{tpu_custom_call.1} parent=11 // pred_check
          %p130 = pneg %p55
        $region14: #{tpu_custom_call.1} parent=11 // pred_check_branch
          %132 = sbr.rel (%p130) target = $region16
        $region15: #{tpu_custom_call.1} parent=11 // pred_region
          %s134 = ssub.s32 16, 16
          %135 = vsyncadd [#allocation3], %s134
          %s137 = sshll.u32 [#allocation2], 4
          %s138 = int_to_ptr.vmem [resolvable:$true] %s137
          %140 = dma.hbm_to_vmem [thread:$0]  %s0, 16, %s138, [#allocation3]
        $region16: #{tpu_custom_call.1} parent=11 // pred_fallthru
          _
      $region12: #{tpu_custom_call.1} parent=5 // pred_fallthru
        _
      %p141 = scmp.lt.s32.totalorder %s15, 4
      // Predicated region
      $region17: #{tpu_custom_call.1} parent=5 // pred_check
        %p142 = pneg %p141
      $region18: #{tpu_custom_call.1} parent=5 // pred_check_branch
        %144 = sbr.rel (%p142) target = $region20
      $region19: #{tpu_custom_call.1} parent=5 // pred_region
        // Predicated region
        $region21: #{tpu_custom_call.1} parent=19 // pred_check
          %p145 = pneg %p79
        $region22: #{tpu_custom_call.1} parent=19 // pred_check_branch
          %147 = sbr.rel (%p145) target = $region24
        $region23: #{tpu_custom_call.1} parent=19 // pred_region
          %s148 = sand.u32 %s69, 1
          %s149 = scalar_lea.sflag [#allocation6], %s148
          %s150 = sand.u32 %s69, 1
          %s151 = smul.addr %s150, 32
          %s152 = scalar_lea.vmem [#allocation5], %s151
          %s153 = smul.u32 2, %s23
          %s154 = smul.u32 2, %s24
          %s156 = ssub.s32 512, 512
          %157 = vsyncadd %s149, %s156
          %s158 = smul.addr %s153, 2
          %s159 = sadd.s32 %s154, %s158
          %s160 = smul.addr %s22, 8
          %s161 = sadd.s32 %s159, %s160
          %s162 = smul.addr %s161, 128
          %s163 = scalar_lea.hbm %s1, %s162
          %s164 = sshll.u32 %s152, 4
          %s165 = int_to_ptr.vmem [resolvable:$true] %s164
          %170 = dma.hbm_to_vmem [thread:$0]  %s163, 512, %s165, %s149, 128, 128, 8
        $region24: #{tpu_custom_call.1} parent=19 // pred_fallthru
          _
      $region20: #{tpu_custom_call.1} parent=5 // pred_fallthru
        _
      %p171 = scmp.le.s32.totalorder 1, %s15
      %p172 = scmp.lt.s32.totalorder %s15, 5
      %p173 = pnand %p171, %p172
      %p174 = pneg %p173
      // Predicated region
      $region25: #{tpu_custom_call.1} parent=5 // pred_check
        _
      $region26: #{tpu_custom_call.1} parent=5 // pred_check_branch
        %176 = sbr.rel (%p173) target = $region28
      $region27: #{tpu_custom_call.1} parent=5 // pred_region
        %s177 = ssub.s32 %s15, 1
        // Predicated region
        $region29: #{tpu_custom_call.1} parent=27 // pred_check
          %p178 = pneg %p55
        $region30: #{tpu_custom_call.1} parent=27 // pred_check_branch
          %180 = sbr.rel (%p178) target = $region32
        $region31: #{tpu_custom_call.1} parent=27 // pred_region
          %181 = dma.done [#allocation3], 16
        $region32: #{tpu_custom_call.1} parent=27 // pred_fallthru
          _
        %s182 = sand.u32 %s72, 1
        %s183 = scalar_lea.sflag [#allocation6], %s182
        %s184 = sand.u32 %s72, 1
        %s185 = smul.addr %s184, 32
        %s186 = scalar_lea.vmem [#allocation5], %s185
        // Predicated region
        $region33: #{tpu_custom_call.1} parent=27 // pred_check
          %p187 = pneg %p85
        $region34: #{tpu_custom_call.1} parent=27 // pred_check_branch
          %189 = sbr.rel (%p187) target = $region36
        $region35: #{tpu_custom_call.1} parent=27 // pred_region
          %190 = dma.done %s183, 512
        $region36: #{tpu_custom_call.1} parent=27 // pred_fallthru
          _
        %p191 = pneg %p55
        %p192 = pneg %p52
        %s193 = sand.u32 %s72, 1
        %s194 = scalar_lea.sflag [#allocation6], %s193
        %s195 = sand.u32 %s72, 1
        %s196 = smul.addr %s195, 32
        %s197 = scalar_lea.vmem [#allocation5], %s196
        %p198 = pneg %p85
        %p199 = pneg %p82
        %p200 = pneg %p115
        %p201 = pneg %p112
        %s202 = sand.u32 %s102, 1
        %s203 = scalar_lea.sflag [#allocation4], %s202
        %s204 = sand.u32 %s102, 1
        %s205 = smul.addr %s204, 32
        %s206 = scalar_lea.vmem [#allocation7], %s205
        %s207 = smul.u32 2, %s26
        %s208 = smul.u32 2, %s27
        %s209 = smul.u32 2, %s26
        %s210 = smul.u32 2, %s27
        %v211 = vlaneseq
        %v212 = vshrl.u32 %v211, 7
        %v213 = vadd.s32 %v212, 8
        %s214 = smul.u32 %s27, 16
        %v215 = vstv %s214
        %v216 = vadd.s32 %v215, %v212
        %v217 = vadd.s32 %v215, %v213
        %v218 = vcvt.s32.f32 %v216
        %v219 = vcvt.s32.f32 %v217
        %v220 = vld [vmem:[#allocation2] sm:$0x1]
        %v222 = vlaneseq
        %v223 = vshrl.u32 %v222, 7
        %v224 = vsub.s32 0, %v223
        %v225 = vrot.slane %v220, %v224
        %v227 = vmul.f32 %v218, %v225
        %v228 = vmul.f32 %v219, %v225
        %v229 = vand.u32 2147483647, %v227
        %vm230 = vcmp.le.f32.partialorder %v229, 0.7853982
        %vm231 = vcmp.lt.s32.totalorder %v227, 0
        %v232 = vand.u32 %v227, 2139095040
        %v233 = vshrl.u32 %v232, 23
        %v234 = vsub.s32 %v233, 127
        %v235 = vand.u32 2147483647, %v227
        %v236 = vand.u32 %v235, 8388607
        %v237 = vor.u32 %v236, 8388608
        %v238 = vsub.s32 0, %v237
        %v239 = vadd.s32 %v234, 1
        %vm240 = vcmp.gt.s32.totalorder %v239, 0
        %v241 = vsel %vm240, %v239, 0
        %v242 = vshrl.u32 %v241, 5
        %v243 = vand.u32 %v241, 31
        %v244 = vsub.s32 32, %v243
        %v245 = vshrl.u32 683565275, %v244
        %v246 = vshll.u32 683565275, %v243
        %v247 = vshrl.u32 2475754826, %v244
        %v248 = vor.u32 %v246, %v247
        %v249 = vshll.u32 2475754826, %v243
        %v250 = vshrl.u32 2131351028, %v244
        %v251 = vor.u32 %v249, %v250
        %v252 = vshll.u32 2131351028, %v243
        %v253 = vshrl.u32 2102212464, %v244
        %v254 = vor.u32 %v252, %v253
        %v255 = vshll.u32 2102212464, %v243
        %v256 = vshrl.u32 920167782, %v244
        %v257 = vor.u32 %v255, %v256
        %v258 = vshll.u32 920167782, %v243
        %v259 = vshrl.u32 1326507024, %v244
        %v260 = vor.u32 %v258, %v259
        %vm261 = vcmp.lt.s32.totalorder %v242, 1
        %vm262 = vcmp.lt.s32.totalorder %v242, 2
        %vm263 = vcmp.lt.s32.totalorder %v242, 3
        %vm264 = vcmp.lt.s32.totalorder %v242, 4
        %v265 = vsel %vm261, %v245, %v248
        %v266 = vsel %vm264, %v254, 2102212464
        %v267 = vsel %vm263, %v251, %v266
        %v268 = vsel %vm262, %v265, %v267
        %v269 = vsel %vm261, %v248, %v251
        %v270 = vsel %vm264, %v257, 920167782
        %v271 = vsel %vm263, %v254, %v270
        %v272 = vsel %vm262, %v269, %v271
        %v273 = vsel %vm261, %v251, %v254
        %v274 = vsel %vm264, %v260, 1326507024
        %v275 = vsel %vm263, %v257, %v274
        %v276 = vsel %vm262, %v273, %v275
        %v277 = vshll.u32 %v237, 8
        %v278 = vmul.u32.u64.compose %v277, %v276
        %v279 = vextract.low.u32 %v278
        %v280 = vextract.high.u32 %v278
        %v281 = vmul.u32.u64.compose %v277, %v272
        %v282 = vextract.low.u32 %v281
        %v283 = vextract.high.u32 %v281
        %v284 = vmul.u32 %v277, %v268
        %v285 = vadd.s32 %v280, %v282
        %vm286 = vc.u32 %v280, %v282
        %v287 = vadd.s32 %v283, 1
        %v288 = vsel %vm286, %v287, %v283
        %v289 = vadd.s32 %v284, %v288
        %v290 = vadd.s32 %v289, 536870912
        %v291 = vshrl.u32 %v290, 30
        %v292 = vshll.u32 %v291, 30
        %v293 = vsub.s32 %v289, %v292
        %vm294 = vcmp.lt.s32.totalorder %v293, 0
        %v295 = vsub.s32 0, %v293
        %v296 = vsel %vm294, %v295, %v293
        %v297 = vclz %v296
        %v298 = vsub.s32 %v297, 2
        %vm299 = vcmp.gt.s32.totalorder 0, %v298
        %v300 = vsel %vm299, 0, %v298
        %v301 = vsub.s32 32, %v300
        %v302 = vshll.u32 %v293, %v300
        %v303 = vshrl.u32 %v285, %v301
        %v304 = vor.u32 %v302, %v303
        %v305 = vsub.s32 4294967266, %v300
        %v306 = vadd.s32 %v305, 127
        %v307 = vshll.u32 %v306, 23
        %v308 = vor.u32 4788187, %v307
        %v309 = vand.u32 2147483647, %v308
        %v311 = vcvt.s32.f32 %v304
        %v312 = vmul.f32 %v311, %v309
        %v313 = vxor.u32 %v312, 2147483648
        %v314 = vsel %vm231, %v313, %v312
        %v315 = vsub.s32 4, %v291
        %v316 = vsel %vm231, %v315, %v291
        %v317 = vsel %vm230, %v227, %v314
        %v318 = vsel %vm230, 0, %v316
        %v319 = vcosq.f32.pop %v317
        %v320 = vsinq.f32.pop %v317
        %vm321 = vweird.f32 %v227
        %v322 = vand.u32 %v318, 3
        %vm323 = vcmp.lt.s32.totalorder %v322, 2
        %vm324 = vcmp.eq.s32.totalorder %v322, 0
        %v325 = vxor.u32 %v320, 2147483648
        %v326 = vsel %vm324, %v319, %v325
        %vm327 = vcmp.eq.s32.totalorder %v322, 2
        %v328 = vxor.u32 %v319, 2147483648
        %v329 = vsel %vm327, %v328, %v320
        %v330 = vsel %vm323, %v326, %v329
        %v331 = vsel %vm321, nan, %v330
        %v332 = vand.u32 2147483647, %v228
        %vm333 = vcmp.le.f32.partialorder %v332, 0.7853982
        %vm334 = vcmp.lt.s32.totalorder %v228, 0
        %v335 = vand.u32 %v228, 2139095040
        %v336 = vshrl.u32 %v335, 23
        %v337 = vsub.s32 %v336, 127
        %v338 = vand.u32 2147483647, %v228
        %v339 = vand.u32 %v338, 8388607
        %v340 = vor.u32 %v339, 8388608
        %v341 = vsub.s32 0, %v340
        %v342 = vadd.s32 %v337, 1
        %vm343 = vcmp.gt.s32.totalorder %v342, 0
        %v344 = vsel %vm343, %v342, 0
        %v345 = vshrl.u32 %v344, 5
        %v346 = vand.u32 %v344, 31
        %v347 = vsub.s32 32, %v346
        %v348 = vshrl.u32 683565275, %v347
        %v349 = vshll.u32 683565275, %v346
        %v350 = vshrl.u32 2475754826, %v347
        %v351 = vor.u32 %v349, %v350
        %v352 = vshll.u32 2475754826, %v346
        %v353 = vshrl.u32 2131351028, %v347
        %v354 = vor.u32 %v352, %v353
        %v355 = vshll.u32 2131351028, %v346
        %v356 = vshrl.u32 2102212464, %v347
        %v357 = vor.u32 %v355, %v356
        %v358 = vshll.u32 2102212464, %v346
        %v359 = vshrl.u32 920167782, %v347
        %v360 = vor.u32 %v358, %v359
        %v361 = vshll.u32 920167782, %v346
        %v362 = vshrl.u32 1326507024, %v347
        %v363 = vor.u32 %v361, %v362
        %vm364 = vcmp.lt.s32.totalorder %v345, 1
        %vm365 = vcmp.lt.s32.totalorder %v345, 2
        %vm366 = vcmp.lt.s32.totalorder %v345, 3
        %vm367 = vcmp.lt.s32.totalorder %v345, 4
        %v368 = vsel %vm364, %v348, %v351
        %v369 = vsel %vm367, %v357, 2102212464
        %v370 = vsel %vm366, %v354, %v369
        %v371 = vsel %vm365, %v368, %v370
        %v372 = vsel %vm364, %v351, %v354
        %v373 = vsel %vm367, %v360, 920167782
        %v374 = vsel %vm366, %v357, %v373
        %v375 = vsel %vm365, %v372, %v374
        %v376 = vsel %vm364, %v354, %v357
        %v377 = vsel %vm367, %v363, 1326507024
        %v378 = vsel %vm366, %v360, %v377
        %v379 = vsel %vm365, %v376, %v378
        %v380 = vshll.u32 %v340, 8
        %v381 = vmul.u32.u64.compose %v380, %v379
        %v382 = vextract.low.u32 %v381
        %v383 = vextract.high.u32 %v381
        %v384 = vmul.u32.u64.compose %v380, %v375
        %v385 = vextract.low.u32 %v384
        %v386 = vextract.high.u32 %v384
        %v387 = vmul.u32 %v380, %v371
        %v388 = vadd.s32 %v383, %v385
        %vm389 = vc.u32 %v383, %v385
        %v390 = vadd.s32 %v386, 1
        %v391 = vsel %vm389, %v390, %v386
        %v392 = vadd.s32 %v387, %v391
        %v393 = vadd.s32 %v392, 536870912
        %v394 = vshrl.u32 %v393, 30
        %v395 = vshll.u32 %v394, 30
        %v396 = vsub.s32 %v392, %v395
        %vm397 = vcmp.lt.s32.totalorder %v396, 0
        %v398 = vsub.s32 0, %v396
        %v399 = vsel %vm397, %v398, %v396
        %v400 = vclz %v399
        %v401 = vsub.s32 %v400, 2
        %vm402 = vcmp.gt.s32.totalorder 0, %v401
        %v403 = vsel %vm402, 0, %v401
        %v404 = vsub.s32 32, %v403
        %v405 = vshll.u32 %v396, %v403
        %v406 = vshrl.u32 %v388, %v404
        %v407 = vor.u32 %v405, %v406
        %v408 = vsub.s32 4294967266, %v403
        %v409 = vadd.s32 %v408, 127
        %v410 = vshll.u32 %v409, 23
        %v411 = vor.u32 4788187, %v410
        %v412 = vand.u32 2147483647, %v411
        %v414 = vcvt.s32.f32 %v407
        %v415 = vmul.f32 %v414, %v412
        %v416 = vxor.u32 %v415, 2147483648
        %v417 = vsel %vm334, %v416, %v415
        %v418 = vsub.s32 4, %v394
        %v419 = vsel %vm334, %v418, %v394
        %v420 = vsel %vm333, %v228, %v417
        %v421 = vsel %vm333, 0, %v419
        %v422 = vcosq.f32.pop %v420
        %v423 = vsinq.f32.pop %v420
        %vm424 = vweird.f32 %v228
        %v425 = vand.u32 %v421, 3
        %vm426 = vcmp.lt.s32.totalorder %v425, 2
        %vm427 = vcmp.eq.s32.totalorder %v425, 0
        %v428 = vxor.u32 %v423, 2147483648
        %v429 = vsel %vm427, %v422, %v428
        %vm430 = vcmp.eq.s32.totalorder %v425, 2
        %v431 = vxor.u32 %v422, 2147483648
        %v432 = vsel %vm430, %v431, %v423
        %v433 = vsel %vm426, %v429, %v432
        %v434 = vsel %vm424, nan, %v433
        %v435 = vand.u32 2147483647, %v227
        %vm436 = vcmp.le.f32.partialorder %v435, 0.7853982
        %vm437 = vcmp.lt.s32.totalorder %v227, 0
        %v438 = vand.u32 %v227, 2139095040
        %v439 = vshrl.u32 %v438, 23
        %v440 = vsub.s32 %v439, 127
        %v441 = vand.u32 2147483647, %v227
        %v442 = vand.u32 %v441, 8388607
        %v443 = vor.u32 %v442, 8388608
        %v444 = vsub.s32 0, %v443
        %v445 = vadd.s32 %v440, 1
        %vm446 = vcmp.gt.s32.totalorder %v445, 0
        %v447 = vsel %vm446, %v445, 0
        %v448 = vshrl.u32 %v447, 5
        %v449 = vand.u32 %v447, 31
        %v450 = vsub.s32 32, %v449
        %v451 = vshrl.u32 683565275, %v450
        %v452 = vshll.u32 683565275, %v449
        %v453 = vshrl.u32 2475754826, %v450
        %v454 = vor.u32 %v452, %v453
        %v455 = vshll.u32 2475754826, %v449
        %v456 = vshrl.u32 2131351028, %v450
        %v457 = vor.u32 %v455, %v456
        %v458 = vshll.u32 2131351028, %v449
        %v459 = vshrl.u32 2102212464, %v450
        %v460 = vor.u32 %v458, %v459
        %v461 = vshll.u32 2102212464, %v449
        %v462 = vshrl.u32 920167782, %v450
        %v463 = vor.u32 %v461, %v462
        %v464 = vshll.u32 920167782, %v449
        %v465 = vshrl.u32 1326507024, %v450
        %v466 = vor.u32 %v464, %v465
        %vm467 = vcmp.lt.s32.totalorder %v448, 1
        %vm468 = vcmp.lt.s32.totalorder %v448, 2
        %vm469 = vcmp.lt.s32.totalorder %v448, 3
        %vm470 = vcmp.lt.s32.totalorder %v448, 4
        %v471 = vsel %vm467, %v451, %v454
        %v472 = vsel %vm470, %v460, 2102212464
        %v473 = vsel %vm469, %v457, %v472
        %v474 = vsel %vm468, %v471, %v473
        %v475 = vsel %vm467, %v454, %v457
        %v476 = vsel %vm470, %v463, 920167782
        %v477 = vsel %vm469, %v460, %v476
        %v478 = vsel %vm468, %v475, %v477
        %v479 = vsel %vm467, %v457, %v460
        %v480 = vsel %vm470, %v466, 1326507024
        %v481 = vsel %vm469, %v463, %v480
        %v482 = vsel %vm468, %v479, %v481
        %v483 = vshll.u32 %v443, 8
        %v484 = vmul.u32.u64.compose %v483, %v482
        %v485 = vextract.low.u32 %v484
        %v486 = vextract.high.u32 %v484
        %v487 = vmul.u32.u64.compose %v483, %v478
        %v488 = vextract.low.u32 %v487
        %v489 = vextract.high.u32 %v487
        %v490 = vmul.u32 %v483, %v474
        %v491 = vadd.s32 %v486, %v488
        %vm492 = vc.u32 %v486, %v488
        %v493 = vadd.s32 %v489, 1
        %v494 = vsel %vm492, %v493, %v489
        %v495 = vadd.s32 %v490, %v494
        %v496 = vadd.s32 %v495, 536870912
        %v497 = vshrl.u32 %v496, 30
        %v498 = vshll.u32 %v497, 30
        %v499 = vsub.s32 %v495, %v498
        %vm500 = vcmp.lt.s32.totalorder %v499, 0
        %v501 = vsub.s32 0, %v499
        %v502 = vsel %vm500, %v501, %v499
        %v503 = vclz %v502
        %v504 = vsub.s32 %v503, 2
        %vm505 = vcmp.gt.s32.totalorder 0, %v504
        %v506 = vsel %vm505, 0, %v504
        %v507 = vsub.s32 32, %v506
        %v508 = vshll.u32 %v499, %v506
        %v509 = vshrl.u32 %v491, %v507
        %v510 = vor.u32 %v508, %v509
        %v511 = vsub.s32 4294967266, %v506
        %v512 = vadd.s32 %v511, 127
        %v513 = vshll.u32 %v512, 23
        %v514 = vor.u32 4788187, %v513
        %v515 = vand.u32 2147483647, %v514
        %v517 = vcvt.s32.f32 %v510
        %v518 = vmul.f32 %v517, %v515
        %v519 = vxor.u32 %v518, 2147483648
        %v520 = vsel %vm437, %v519, %v518
        %v521 = vsub.s32 4, %v497
        %v522 = vsel %vm437, %v521, %v497
        %v523 = vsel %vm436, %v227, %v520
        %v524 = vsel %vm436, 0, %v522
        %v525 = vcosq.f32.pop %v523
        %v526 = vsinq.f32.pop %v523
        %vm527 = vweird.f32 %v227
        %v528 = vadd.s32 %v524, 3
        %v529 = vand.u32 %v528, 3
        %vm530 = vcmp.lt.s32.totalorder %v529, 2
        %vm531 = vcmp.eq.s32.totalorder %v529, 0
        %v532 = vxor.u32 %v526, 2147483648
        %v533 = vsel %vm531, %v525, %v532
        %vm534 = vcmp.eq.s32.totalorder %v529, 2
        %v535 = vxor.u32 %v525, 2147483648
        %v536 = vsel %vm534, %v535, %v526
        %v537 = vsel %vm530, %v533, %v536
        %v538 = vsel %vm527, nan, %v537
        %v539 = vand.u32 2147483647, %v228
        %vm540 = vcmp.le.f32.partialorder %v539, 0.7853982
        %vm541 = vcmp.lt.s32.totalorder %v228, 0
        %v542 = vand.u32 %v228, 2139095040
        %v543 = vshrl.u32 %v542, 23
        %v544 = vsub.s32 %v543, 127
        %v545 = vand.u32 2147483647, %v228
        %v546 = vand.u32 %v545, 8388607
        %v547 = vor.u32 %v546, 8388608
        %v548 = vsub.s32 0, %v547
        %v549 = vadd.s32 %v544, 1
        %vm550 = vcmp.gt.s32.totalorder %v549, 0
        %v551 = vsel %vm550, %v549, 0
        %v552 = vshrl.u32 %v551, 5
        %v553 = vand.u32 %v551, 31
        %v554 = vsub.s32 32, %v553
        %v555 = vshrl.u32 683565275, %v554
        %v556 = vshll.u32 683565275, %v553
        %v557 = vshrl.u32 2475754826, %v554
        %v558 = vor.u32 %v556, %v557
        %v559 = vshll.u32 2475754826, %v553
        %v560 = vshrl.u32 2131351028, %v554
        %v561 = vor.u32 %v559, %v560
        %v562 = vshll.u32 2131351028, %v553
        %v563 = vshrl.u32 2102212464, %v554
        %v564 = vor.u32 %v562, %v563
        %v565 = vshll.u32 2102212464, %v553
        %v566 = vshrl.u32 920167782, %v554
        %v567 = vor.u32 %v565, %v566
        %v568 = vshll.u32 920167782, %v553
        %v569 = vshrl.u32 1326507024, %v554
        %v570 = vor.u32 %v568, %v569
        %vm571 = vcmp.lt.s32.totalorder %v552, 1
        %vm572 = vcmp.lt.s32.totalorder %v552, 2
        %vm573 = vcmp.lt.s32.totalorder %v552, 3
        %vm574 = vcmp.lt.s32.totalorder %v552, 4
        %v575 = vsel %vm571, %v555, %v558
        %v576 = vsel %vm574, %v564, 2102212464
        %v577 = vsel %vm573, %v561, %v576
        %v578 = vsel %vm572, %v575, %v577
        %v579 = vsel %vm571, %v558, %v561
        %v580 = vsel %vm574, %v567, 920167782
        %v581 = vsel %vm573, %v564, %v580
        %v582 = vsel %vm572, %v579, %v581
        %v583 = vsel %vm571, %v561, %v564
        %v584 = vsel %vm574, %v570, 1326507024
        %v585 = vsel %vm573, %v567, %v584
        %v586 = vsel %vm572, %v583, %v585
        %v587 = vshll.u32 %v547, 8
        %v588 = vmul.u32.u64.compose %v587, %v586
        %v589 = vextract.low.u32 %v588
        %v590 = vextract.high.u32 %v588
        %v591 = vmul.u32.u64.compose %v587, %v582
        %v592 = vextract.low.u32 %v591
        %v593 = vextract.high.u32 %v591
        %v594 = vmul.u32 %v587, %v578
        %v595 = vadd.s32 %v590, %v592
        %vm596 = vc.u32 %v590, %v592
        %v597 = vadd.s32 %v593, 1
        %v598 = vsel %vm596, %v597, %v593
        %v599 = vadd.s32 %v594, %v598
        %v600 = vadd.s32 %v599, 536870912
        %v601 = vshrl.u32 %v600, 30
        %v602 = vshll.u32 %v601, 30
        %v603 = vsub.s32 %v599, %v602
        %vm604 = vcmp.lt.s32.totalorder %v603, 0
        %v605 = vsub.s32 0, %v603
        %v606 = vsel %vm604, %v605, %v603
        %v607 = vclz %v606
        %v608 = vsub.s32 %v607, 2
        %vm609 = vcmp.gt.s32.totalorder 0, %v608
        %v610 = vsel %vm609, 0, %v608
        %v611 = vsub.s32 32, %v610
        %v612 = vshll.u32 %v603, %v610
        %v613 = vshrl.u32 %v595, %v611
        %v614 = vor.u32 %v612, %v613
        %v615 = vsub.s32 4294967266, %v610
        %v616 = vadd.s32 %v615, 127
        %v617 = vshll.u32 %v616, 23
        %v618 = vor.u32 4788187, %v617
        %v619 = vand.u32 2147483647, %v618
        %v621 = vcvt.s32.f32 %v614
        %v622 = vmul.f32 %v621, %v619
        %v623 = vxor.u32 %v622, 2147483648
        %v624 = vsel %vm541, %v623, %v622
        %v625 = vsub.s32 4, %v601
        %v626 = vsel %vm541, %v625, %v601
        %v627 = vsel %vm540, %v228, %v624
        %v628 = vsel %vm540, 0, %v626
        %v629 = vcosq.f32.pop %v627
        %v630 = vsinq.f32.pop %v627
        %vm631 = vweird.f32 %v228
        %v632 = vadd.s32 %v628, 3
        %v633 = vand.u32 %v632, 3
        %vm634 = vcmp.lt.s32.totalorder %v633, 2
        %vm635 = vcmp.eq.s32.totalorder %v633, 0
        %v636 = vxor.u32 %v630, 2147483648
        %v637 = vsel %vm635, %v629, %v636
        %vm638 = vcmp.eq.s32.totalorder %v633, 2
        %v639 = vxor.u32 %v629, 2147483648
        %v640 = vsel %vm638, %v639, %v630
        %v641 = vsel %vm634, %v637, %v640
        %v642 = vsel %vm631, nan, %v641
        %v643 = vld [vmem:[%s186] sm:$0xff]
        %v644 = vld [vmem:[%s186 + $0x8] sm:$0xff]
        %v645 = vld [vmem:[%s186 + $0x10] sm:$0xff]
        %v646 = vld [vmem:[%s186 + $0x18] sm:$0xff]
        %647 = vrot.lane.b32.xlu0 %v643, 64
        %v648 = vpop.permute.xlu0 %647
        %649 = vrot.lane.b32.xlu0 %v644, 64
        %v650 = vpop.permute.xlu0 %649
        %651 = vrot.lane.b32.xlu0 %v645, 64
        %v652 = vpop.permute.xlu0 %651
        %653 = vrot.lane.b32.xlu0 %v646, 64
        %v654 = vpop.permute.xlu0 %653
        %v655 = vmul.f32 %v643, %v331
        %v656 = vmul.f32 %v644, %v434
        %v657 = vmul.f32 %v645, %v331
        %v658 = vmul.f32 %v646, %v434
        %v659 = vmul.f32 %v648, %v538
        %v660 = vmul.f32 %v650, %v642
        %v661 = vmul.f32 %v652, %v538
        %v662 = vmul.f32 %v654, %v642
        %v663 = vadd.f32 %v655, %v659
        %v664 = vadd.f32 %v656, %v660
        %v665 = vadd.f32 %v657, %v661
        %v666 = vadd.f32 %v658, %v662
        %667 = vst [vmem:[%s206] sm:$0xff] %v663
        %668 = vst [vmem:[%s206 + $0x8] sm:$0xff] %v664
        %669 = vst [vmem:[%s206 + $0x10] sm:$0xff] %v665
        %670 = vst [vmem:[%s206 + $0x18] sm:$0xff] %v666
        %s671 = sand.u32 %s102, 1
        %s672 = scalar_lea.sflag [#allocation4], %s671
        %s673 = sand.u32 %s102, 1
        %s674 = smul.addr %s673, 32
        %s675 = scalar_lea.vmem [#allocation7], %s674
        // Predicated region
        $region37: #{tpu_custom_call.1} parent=27 // pred_check
          %p676 = pneg %p112
        $region38: #{tpu_custom_call.1} parent=27 // pred_check_branch
          %678 = sbr.rel (%p676) target = $region40
        $region39: #{tpu_custom_call.1} parent=27 // pred_region
          %s679 = smul.u32 2, %s26
          %s680 = smul.u32 2, %s27
          %s682 = ssub.s32 512, 512
          %683 = vsyncadd %s672, %s682
          %s684 = smul.addr %s679, 2
          %s685 = sadd.s32 %s680, %s684
          %s686 = smul.addr %s25, 8
          %s687 = sadd.s32 %s685, %s686
          %s688 = smul.addr %s687, 128
          %s689 = scalar_lea.hbm %s2, %s688
          %s690 = sshll.u32 %s675, 4
          %s691 = int_to_ptr.vmem [resolvable:$true] %s690
          %696 = dma.vmem_to_hbm [thread:$0]  %s691, 512, %s689, %s672, 128, 128, 8
        $region40: #{tpu_custom_call.1} parent=27 // pred_fallthru
          _
      $region28: #{tpu_custom_call.1} parent=5 // pred_fallthru
        _
      %p697 = scmp.le.s32.totalorder 2, %s15
      // Predicated region
      $region41: #{tpu_custom_call.1} parent=5 // pred_check
        %p698 = pneg %p697
      $region42: #{tpu_custom_call.1} parent=5 // pred_check_branch
        %700 = sbr.rel (%p698) target = $region44
      $region43: #{tpu_custom_call.1} parent=5 // pred_region
        %s701 = ssub.s32 %s15, 2
        // Predicated region
        $region45: #{tpu_custom_call.1} parent=43 // pred_check
          %p702 = pneg %p118
        $region46: #{tpu_custom_call.1} parent=43 // pred_check_branch
          %704 = sbr.rel (%p702) target = $region48
        $region47: #{tpu_custom_call.1} parent=43 // pred_region
          %s705 = sand.u32 %s103, 1
          %s706 = scalar_lea.sflag [#allocation4], %s705
          %s707 = sand.u32 %s103, 1
          %s708 = smul.addr %s707, 32
          %s709 = scalar_lea.vmem [#allocation7], %s708
          %710 = dma.done %s706, 512
        $region48: #{tpu_custom_call.1} parent=43 // pred_fallthru
          _
      $region44: #{tpu_custom_call.1} parent=5 // pred_fallthru
        _
    $region6: #{tpu_custom_call.1} parent=1 // loop_footer
      %s19 = sadd.s32 1, %s15
    $region7: #{tpu_custom_call.1} parent=1 // loop_footer_branch
      %14 = sbr.rel target = $region3
    $region8: #{tpu_custom_call.1} parent=1 // loop_exit
      _
    %711 = vsyncpa [#allocation3], 1
    %s712 = scalar_lea.sflag [#allocation3], 1
    %713 = vsyncpa %s712, 1
    %714 = vsyncpa [#allocation6], 1
    %s715 = scalar_lea.sflag [#allocation6], 1
    %716 = vsyncpa %s715, 1
    %717 = vsyncpa [#allocation4], 1
    %s718 = scalar_lea.sflag [#allocation4], 1
    %719 = vsyncpa %s718, 1

</llo_original>
